<compile_context>
chip_gen: v5e
topology: v5e:2x2
jax: 0.10.0
libtpu: 0.0.40
codegen_flags: <defaults>
</compile_context>

<pallas_src>
import functools

import jax
import jax.numpy as jnp
from jax.experimental import pallas as pl
from jax.experimental.pallas import tpu as pltpu  # noqa: F401  (scaling path / dropout TODO)


def _round_up(n, m):
    return ((n + m - 1) // m) * m


def _fused_mlp_kernel(x_ref, w_ref, b_ref, o_ref, *, num_layers, neg_slope):
    """x_ref: (Mp, P) f32, w_ref: (L, P, P) bf16, b_ref: (L, 1, P) f32, o_ref: (Mp, P) f32.

    Hidden layers: Linear -> LeakyReLU(neg_slope) -> Dropout(p=0.0) (identity).
    Last layer:    Linear -> exact Sigmoid.
    All intermediates stay in vregs/VMEM; one MXU dot per layer (f32 accumulation).
    Padding correctness: padded weight rows/cols and bias entries are zero, so padded
    hidden columns stay exactly 0 through LeakyReLU and never contaminate real outputs.
    """
    h = x_ref[...]  # f32
    for i in range(num_layers):
        w = w_ref[i]        # (P, P), static index -> plain load
        b = b_ref[i]        # (1, P) f32, broadcasts over rows
        y = jnp.dot(h.astype(w.dtype), w, preferred_element_type=jnp.float32) + b
        if i < num_layers - 1:
            # PyTorch nn.LeakyReLU default negative_slope = 0.01
            h = jnp.where(y > 0, y, neg_slope * y)
            # Dropout(p=0.0) / eval mode is identity.
            # TODO(synk): nonzero dropout_prob in training mode would fuse a
            # pltpu.prng_seed + pltpu.prng_random_bits mask here (applied before the
            # output slice so padded lanes never alias real lanes).
        else:
            # Exact sigmoid; exp rides the EUP slot, divide is exact (no approx recip).
            h = 1.0 / (1.0 + jnp.exp(-y))
    o_ref[...] = h.astype(o_ref.dtype)


def prepare_params(params, weights_dtype=jnp.bfloat16):
    """ONE-TIME prep: pad every layer to a common 128-aligned width P and stack.

    params: list of (w (in, out) f32, b (1, out) f32).
    Returns (w_stack (L, P, P) weights_dtype, b_stack (L, 1, P) f32).
    Zero padding is what makes the uniform-P stacking mathematically exact.
    """
    feat = [params[0][0].shape[0]] + [w.shape[1] for w, _ in params]
    P = max(_round_up(f, 128) for f in feat)
    L = len(params)
    w_stack = jnp.zeros((L, P, P), weights_dtype)
    b_stack = jnp.zeros((L, 1, P), jnp.float32)
    for i, (w, b) in enumerate(params):
        k, n = w.shape
        w_stack = w_stack.at[i, :k, :n].set(w.astype(weights_dtype))
        b_stack = b_stack.at[i, :, :n].set(b.astype(jnp.float32))
    return w_stack, b_stack


@functools.partial(jax.jit, static_argnums=(3,))
def simple_fc_forward(x, w_stack, b_stack, out_features):
    """SimpleFC forward as one fused Pallas kernel over pre-padded stacked params."""
    M, K = x.shape
    L, P, _ = w_stack.shape
    Mp = _round_up(M, 8)
    # Only the (per-call) activation needs padding now; params were padded at init.
    x_p = jnp.pad(x.astype(jnp.float32), ((0, Mp - M), (0, P - K)))

    cost = pl.CostEstimate(
        flops=2 * Mp * L * P * P + Mp * L * P,       # L matmuls + bias adds
        transcendentals=Mp * P,                       # final-layer exp
        bytes_accessed=(
            x_p.size * x_p.dtype.itemsize
            + w_stack.size * w_stack.dtype.itemsize
            + b_stack.size * b_stack.dtype.itemsize
            + Mp * P * 4
        ),
    )

    out_p = pl.pallas_call(
        functools.partial(_fused_mlp_kernel, num_layers=L, neg_slope=0.01),
        out_shape=jax.ShapeDtypeStruct((Mp, P), jnp.float32),
        in_specs=[
            pl.BlockSpec((Mp, P), lambda: (0, 0)),
            pl.BlockSpec((L, P, P), lambda: (0, 0, 0)),
            pl.BlockSpec((L, 1, P), lambda: (0, 0, 0)),
        ],
        out_specs=pl.BlockSpec((Mp, P), lambda: (0, 0)),
        cost_estimate=cost,
    )(x_p, w_stack, b_stack)
    return out_p[:M, :out_features]


def init_simple_fc_params(key, input_size, hidden_sizes, output_size):
    """Deterministic synthetic parameters mirroring nn.Linear init/shapes.

    PyTorch nn.Linear stores weight (out, in); we store the transpose (in, out)
    so the kernel does x @ W directly. Bias kept 2D (1, out) for TPU layout.
    """
    layer_sizes = [input_size] + list(hidden_sizes) + [output_size]
    params = []
    for i in range(len(layer_sizes) - 1):
        fan_in, fan_out = layer_sizes[i], layer_sizes[i + 1]
        key, kw, kb = jax.random.split(key, 3)
        bound = 1.0 / jnp.sqrt(fan_in)
        w = jax.random.uniform(kw, (fan_in, fan_out), jnp.float32, -bound, bound)
        b = jax.random.uniform(kb, (1, fan_out), jnp.float32, -bound, bound)
        params.append((w, b))
    return params


if __name__ == "__main__":
    # Small shapes consistent with the module: batch=4, input=32, hidden=[64, 32], output=8
    batch, input_size, hidden_sizes, output_size = 4, 32, [64, 32], 8

    key = jax.random.PRNGKey(0)
    kx, kp = jax.random.split(key)
    x = jax.random.normal(kx, (batch, input_size), jnp.float32)
    params = init_simple_fc_params(kp, input_size, hidden_sizes, output_size)

    # One-time pre-pad + stack (never repeated per forward call).
    w_stack, b_stack = prepare_params(params)

    out = simple_fc_forward(x, w_stack, b_stack, output_size)
    out = jax.block_until_ready(out)

    # Plain-JAX reference using the SAME bf16-rounded weights (cast back to f32), so the
    # only remaining kernel-vs-reference delta is the bf16 activation operand on the MXU
    # (f32 accumulation). Exact sigmoid in both.
    ref = x
    for i, (w, b) in enumerate(params):
        w_q = w.astype(jnp.bfloat16).astype(jnp.float32)
        ref = ref @ w_q + b
        if i < len(params) - 1:
            ref = jnp.where(ref > 0, ref, 0.01 * ref)
        else:
            ref = jax.nn.sigmoid(ref)

    assert out.shape == (batch, output_size)
    assert jnp.allclose(out, ref, atol=1e-2, rtol=1e-2)

    print("KERNEL_OK")
</pallas_src>

<mosaic_0001>
module attributes {stable_mosaic.version = 11 : i64} {
  func.func @_fused_mlp_kernel(%arg0: memref<8x128xf32, #tpu.memory_space<vmem>>, %arg1: memref<3x128x128xbf16, #tpu.memory_space<vmem>>, %arg2: memref<3x1x128xf32, #tpu.memory_space<vmem>>, %arg3: memref<8x128xf32, #tpu.memory_space<vmem>>) attributes {dimension_semantics = [], scalar_prefetch = 0 : i64, scratch_operands = 0 : i64, tpu.core_type = #tpu.core_type<tc>} {
    %c0 = arith.constant 0 : index
    %c0_0 = arith.constant 0 : index
    %0 = vector.load %arg0[%c0, %c0_0] : memref<8x128xf32, #tpu.memory_space<vmem>>, vector<8x128xf32>
    %c0_1 = arith.constant 0 : index
    %c0_2 = arith.constant 0 : index
    %c0_3 = arith.constant 0 : index
    %1 = vector.load %arg1[%c0_1, %c0_2, %c0_3] : memref<3x128x128xbf16, #tpu.memory_space<vmem>>, vector<1x128x128xbf16>
    %2 = vector.shape_cast %1 : vector<1x128x128xbf16> to vector<128x128xbf16>
    %c0_4 = arith.constant 0 : index
    %c0_5 = arith.constant 0 : index
    %c0_6 = arith.constant 0 : index
    %3 = vector.load %arg2[%c0_4, %c0_5, %c0_6] : memref<3x1x128xf32, #tpu.memory_space<vmem>>, vector<1x1x128xf32>
    %4 = vector.shape_cast %3 : vector<1x1x128xf32> to vector<1x128xf32>
    %5 = arith.truncf %0 : vector<8x128xf32> to vector<8x128xbf16>
    %cst = arith.constant dense<0.000000e+00> : vector<8x128xf32>
    %6 = tpu.matmul %5, %2, %cst {dimension_numbers = #tpu.dot_dimension_numbers<[1], [0], [0], [1], [0, 0, 1, 1], [], []>} : vector<8x128xbf16>, vector<128x128xbf16>, vector<8x128xf32> -> vector<8x128xf32>
    %7 = vector.broadcast %4 : vector<1x128xf32> to vector<8x128xf32>
    %8 = arith.addf %6, %7 : vector<8x128xf32>
    %cst_7 = arith.constant 0.000000e+00 : f32
    %9 = vector.broadcast %cst_7 : f32 to vector<8x128xf32>
    %10 = arith.cmpf ogt, %8, %9 : vector<8x128xf32>
    %cst_8 = arith.constant 0.00999999977 : f32
    %11 = vector.broadcast %cst_8 : f32 to vector<8x128xf32>
    %12 = arith.mulf %11, %8 : vector<8x128xf32>
    %13 = arith.select %10, %8, %12 : vector<8x128xi1>, vector<8x128xf32>
    %c1 = arith.constant 1 : index
    %c0_9 = arith.constant 0 : index
    %c0_10 = arith.constant 0 : index
    %14 = vector.load %arg1[%c1, %c0_9, %c0_10] : memref<3x128x128xbf16, #tpu.memory_space<vmem>>, vector<1x128x128xbf16>
    %15 = vector.shape_cast %14 : vector<1x128x128xbf16> to vector<128x128xbf16>
    %c1_11 = arith.constant 1 : index
    %c0_12 = arith.constant 0 : index
    %c0_13 = arith.constant 0 : index
    %16 = vector.load %arg2[%c1_11, %c0_12, %c0_13] : memref<3x1x128xf32, #tpu.memory_space<vmem>>, vector<1x1x128xf32>
    %17 = vector.shape_cast %16 : vector<1x1x128xf32> to vector<1x128xf32>
    %18 = arith.truncf %13 : vector<8x128xf32> to vector<8x128xbf16>
    %cst_14 = arith.constant dense<0.000000e+00> : vector<8x128xf32>
    %19 = tpu.matmul %18, %15, %cst_14 {dimension_numbers = #tpu.dot_dimension_numbers<[1], [0], [0], [1], [0, 0, 1, 1], [], []>} : vector<8x128xbf16>, vector<128x128xbf16>, vector<8x128xf32> -> vector<8x128xf32>
    %20 = vector.broadcast %17 : vector<1x128xf32> to vector<8x128xf32>
    %21 = arith.addf %19, %20 : vector<8x128xf32>
    %cst_15 = arith.constant 0.000000e+00 : f32
    %22 = vector.broadcast %cst_15 : f32 to vector<8x128xf32>
    %23 = arith.cmpf ogt, %21, %22 : vector<8x128xf32>
    %cst_16 = arith.constant 0.00999999977 : f32
    %24 = vector.broadcast %cst_16 : f32 to vector<8x128xf32>
    %25 = arith.mulf %24, %21 : vector<8x128xf32>
    %26 = arith.select %23, %21, %25 : vector<8x128xi1>, vector<8x128xf32>
    %c2 = arith.constant 2 : index
    %c0_17 = arith.constant 0 : index
    %c0_18 = arith.constant 0 : index
    %27 = vector.load %arg1[%c2, %c0_17, %c0_18] : memref<3x128x128xbf16, #tpu.memory_space<vmem>>, vector<1x128x128xbf16>
    %28 = vector.shape_cast %27 : vector<1x128x128xbf16> to vector<128x128xbf16>
    %c2_19 = arith.constant 2 : index
    %c0_20 = arith.constant 0 : index
    %c0_21 = arith.constant 0 : index
    %29 = vector.load %arg2[%c2_19, %c0_20, %c0_21] : memref<3x1x128xf32, #tpu.memory_space<vmem>>, vector<1x1x128xf32>
    %30 = vector.shape_cast %29 : vector<1x1x128xf32> to vector<1x128xf32>
    %31 = arith.truncf %26 : vector<8x128xf32> to vector<8x128xbf16>
    %cst_22 = arith.constant dense<0.000000e+00> : vector<8x128xf32>
    %32 = tpu.matmul %31, %28, %cst_22 {dimension_numbers = #tpu.dot_dimension_numbers<[1], [0], [0], [1], [0, 0, 1, 1], [], []>} : vector<8x128xbf16>, vector<128x128xbf16>, vector<8x128xf32> -> vector<8x128xf32>
    %33 = vector.broadcast %30 : vector<1x128xf32> to vector<8x128xf32>
    %34 = arith.addf %32, %33 : vector<8x128xf32>
    %cst_23 = arith.constant 0.000000e+00 : f32
    %35 = vector.broadcast %cst_23 : f32 to vector<8x128xf32>
    %36 = arith.subf %35, %34 : vector<8x128xf32>
    %37 = math.exp %36 : vector<8x128xf32>
    %cst_24 = arith.constant 1.000000e+00 : f32
    %38 = vector.broadcast %cst_24 : f32 to vector<8x128xf32>
    %39 = arith.addf %38, %37 : vector<8x128xf32>
    %cst_25 = arith.constant 1.000000e+00 : f32
    %40 = vector.broadcast %cst_25 : f32 to vector<8x128xf32>
    %41 = arith.divf %40, %39 : vector<8x128xf32>
    %c0_26 = arith.constant 0 : index
    %c0_27 = arith.constant 0 : index
    %42 = vector.load %arg3[%c0_26, %c0_27] : memref<8x128xf32, #tpu.memory_space<vmem>>, vector<8x128xf32>
    tpu.vector_store %arg3[%c0_26, %c0_27], %41 {strides = array<i32>} : memref<8x128xf32, #tpu.memory_space<vmem>>, vector<8x128xf32>,
    return
  }
}

</mosaic_0001>

<llo_original>
// kernel: simple_fc_forward.1
$region0: #{simple_fc_forward.1}
  #allocation0 [shape = 'u32[]', space=smem, size = 0x4, offset = 0x4, fixed_abs, tag = 'smem constant byte address 0x4 - core index']
  #allocation1 [shape = 'u32[72,128]{1,0:T(1,128)}', space=vmem, size = 0x9000, scoped, tag = 'internal scratch']
  %s0 = inlined_call_operand.vmem [shape: f32[8,128], index: 0, kind: input, shape index: {}]
  %s1 = inlined_call_operand.hbm [shape: bf16[3,128,128], index: 1, kind: input, shape index: {}]
  %s2 = inlined_call_operand.vmem [shape: f32[3,1,128], index: 2, kind: input, shape index: {}]
  %s3 = inlined_call_operand.vmem [shape: f32[8,128], index: 3, kind: output, shape index: {}]
  %s4 = sld [smem:[#allocation0]]
  $region26: #{simple_fc_forward.1} parent=0
    _
  %s6 = ssub.s32 1, %s4
  %s7 = scalar_select 0, %s6, %s4
  $region1: #{simple_fc_forward.1} parent=0
    #allocation2 [shape = 'u8[98304]{0}', space=vmem, size = 0x18000, scoped, tag = 'input window, operand 1, single buffered']
    #allocation3 [shape = 's32[1]{0}', space=sflag, size = 0x4, scoped, tag = 'scoped memory for simple_fc_forward.1']
    %8 = vsyncpa [#allocation3], 0
    // Predicated region
    $region2: #{simple_fc_forward.1} parent=1 // pred_check
      _
    $region3: #{simple_fc_forward.1} parent=1 // pred_check_branch
      %10 = sbr.rel (0) target = $region5
    $region4: #{simple_fc_forward.1} parent=1 // pred_region
      _
    $region5: #{simple_fc_forward.1} parent=1 // pred_fallthru
      _
    // Predicated region
    $region6: #{simple_fc_forward.1} parent=1 // pred_check
      _
    $region7: #{simple_fc_forward.1} parent=1 // pred_check_branch
      %12 = sbr.rel (0) target = $region9
    $region8: #{simple_fc_forward.1} parent=1 // pred_region
      %14 = vsyncadd [#allocation3], 0
      %s15 = sshll.u32 %s1, 4
      %s16 = int_to_ptr.hbm [resolvable:$true] %s15
      %s17 = sshll.u32 [#allocation2], 4
      %s18 = int_to_ptr.vmem [resolvable:$true] %s17
      %23 = dma.hbm_to_vmem [thread:$0]  %s16, 3072, %s18, [#allocation3], 64, 64, 4
    $region9: #{simple_fc_forward.1} parent=1 // pred_fallthru
      _
    // Predicated region
    $region10: #{simple_fc_forward.1} parent=1 // pred_check
      _
    $region11: #{simple_fc_forward.1} parent=1 // pred_check_branch
      %25 = sbr.rel (0) target = $region13
    $region12: #{simple_fc_forward.1} parent=1 // pred_region
      _
    $region13: #{simple_fc_forward.1} parent=1 // pred_fallthru
      _
    // Predicated region
    $region14: #{simple_fc_forward.1} parent=1 // pred_check
      _
    $region15: #{simple_fc_forward.1} parent=1 // pred_check_branch
      %27 = sbr.rel (0) target = $region17
    $region16: #{simple_fc_forward.1} parent=1 // pred_region
      %29 = dma.done [#allocation3], 3072
    $region17: #{simple_fc_forward.1} parent=1 // pred_fallthru
      _
    %v30 = vld [vmem:[%s0] sm:$0xff]
    %v31 = vld [vmem:[#allocation2] sm:$0xf]
    %v32 = vld [vmem:[#allocation2 + $0x4] sm:$0xf]
    %v33 = vld [vmem:[#allocation2 + $0x8] sm:$0xf]
    %v34 = vld [vmem:[#allocation2 + $0xc] sm:$0xf]
    %v35 = vld [vmem:[#allocation2 + $0x10] sm:$0xf]
    %v36 = vld [vmem:[#allocation2 + $0x14] sm:$0xf]
    %v37 = vld [vmem:[#allocation2 + $0x18] sm:$0xf]
    %v38 = vld [vmem:[#allocation2 + $0x1c] sm:$0xf]
    %v39 = vld [vmem:[#allocation2 + $0x20] sm:$0xf]
    %v40 = vld [vmem:[#allocation2 + $0x24] sm:$0xf]
    %v41 = vld [vmem:[#allocation2 + $0x28] sm:$0xf]
    %v42 = vld [vmem:[#allocation2 + $0x2c] sm:$0xf]
    %v43 = vld [vmem:[#allocation2 + $0x30] sm:$0xf]
    %v44 = vld [vmem:[#allocation2 + $0x34] sm:$0xf]
    %v45 = vld [vmem:[#allocation2 + $0x38] sm:$0xf]
    %v46 = vld [vmem:[#allocation2 + $0x3c] sm:$0xf]
    %v47 = vld [vmem:[%s2] sm:$0x1]
    %v48 = vpack.c.bf16 %v30, %v30
    %v50 = vperm.slane %v47, 0
    %v68 = vunpack.c.l.b16 %v31
    %v69 = vunpack.c.l.b16 %v32
    %v70 = vunpack.c.l.b16 %v33
    %v71 = vunpack.c.l.b16 %v34
    %v72 = vunpack.c.l.b16 %v35
    %v73 = vunpack.c.l.b16 %v36
    %v74 = vunpack.c.l.b16 %v37
    %v75 = vunpack.c.l.b16 %v38
    %v76 = vunpack.c.l.b16 %v39
    %v77 = vunpack.c.l.b16 %v40
    %v78 = vunpack.c.l.b16 %v41
    %v79 = vunpack.c.l.b16 %v42
    %v80 = vunpack.c.l.b16 %v43
    %v81 = vunpack.c.l.b16 %v44
    %v82 = vunpack.c.l.b16 %v45
    %v83 = vunpack.c.l.b16 %v46
    %v84 = vpack.c.b16 %v69, %v68
    %v85 = vpack.c.b16 %v71, %v70
    %v86 = vpack.c.b16 %v73, %v72
    %v87 = vpack.c.b16 %v75, %v74
    %v88 = vpack.c.b16 %v77, %v76
    %v89 = vpack.c.b16 %v79, %v78
    %v90 = vpack.c.b16 %v81, %v80
    %v91 = vpack.c.b16 %v83, %v82
    %100 = vmatpush.bf16.msra.mxu0 %v91
    %101 = vmatpush.bf16.msra.mxu0 %v90
    %102 = vmatpush.bf16.msra.mxu0 %v89
    %103 = vmatpush.bf16.msra.mxu0 %v88
    %104 = vmatpush.bf16.msra.mxu0 %v87
    %105 = vmatpush.bf16.msra.mxu0 %v86
    %106 = vmatpush.bf16.msra.mxu0 %v85
    %107 = vmatpush.bf16.msra.mxu0 %v84
    %108 = vmatmul.bf16.gmra.mxu0 %v48
    %v109 = vpop.f32.mrf.mxu0
    %v110 = vadd.f32 %v50, %v109
    %v111 = vpop.f32.mrf.mxu0
    %112 = vdwg.mxu0
    %vm113 = vcmp.gt.f32.partialorder %v110, 0.0
    %v114 = vmul.f32 %v110, 0.01
    %v115 = vsel %vm113, %v110, %v114
    %s116 = scalar_lea.vmem [#allocation2], 64
    %v117 = vld [vmem:[%s116] sm:$0xf]
    %v118 = vld [vmem:[%s116 + $0x4] sm:$0xf]
    %v119 = vld [vmem:[%s116 + $0x8] sm:$0xf]
    %v120 = vld [vmem:[%s116 + $0xc] sm:$0xf]
    %v121 = vld [vmem:[%s116 + $0x10] sm:$0xf]
    %v122 = vld [vmem:[%s116 + $0x14] sm:$0xf]
    %v123 = vld [vmem:[%s116 + $0x18] sm:$0xf]
    %v124 = vld [vmem:[%s116 + $0x1c] sm:$0xf]
    %v125 = vld [vmem:[%s116 + $0x20] sm:$0xf]
    %v126 = vld [vmem:[%s116 + $0x24] sm:$0xf]
    %v127 = vld [vmem:[%s116 + $0x28] sm:$0xf]
    %v128 = vld [vmem:[%s116 + $0x2c] sm:$0xf]
    %v129 = vld [vmem:[%s116 + $0x30] sm:$0xf]
    %v130 = vld [vmem:[%s116 + $0x34] sm:$0xf]
    %v131 = vld [vmem:[%s116 + $0x38] sm:$0xf]
    %v132 = vld [vmem:[%s116 + $0x3c] sm:$0xf]
    %s133 = scalar_lea.vmem %s2, 1
    %v134 = vld [vmem:[%s133] sm:$0x1]
    %v135 = vpack.c.bf16 %v115, %v115
    %v137 = vperm.slane %v134, 0
    %v155 = vunpack.c.l.b16 %v117
    %v156 = vunpack.c.l.b16 %v118
    %v157 = vunpack.c.l.b16 %v119
    %v158 = vunpack.c.l.b16 %v120
    %v159 = vunpack.c.l.b16 %v121
    %v160 = vunpack.c.l.b16 %v122
    %v161 = vunpack.c.l.b16 %v123
    %v162 = vunpack.c.l.b16 %v124
    %v163 = vunpack.c.l.b16 %v125
    %v164 = vunpack.c.l.b16 %v126
    %v165 = vunpack.c.l.b16 %v127
    %v166 = vunpack.c.l.b16 %v128
    %v167 = vunpack.c.l.b16 %v129
    %v168 = vunpack.c.l.b16 %v130
    %v169 = vunpack.c.l.b16 %v131
    %v170 = vunpack.c.l.b16 %v132
    %v171 = vpack.c.b16 %v156, %v155
    %v172 = vpack.c.b16 %v158, %v157
    %v173 = vpack.c.b16 %v160, %v159
    %v174 = vpack.c.b16 %v162, %v161
    %v175 = vpack.c.b16 %v164, %v163
    %v176 = vpack.c.b16 %v166, %v165
    %v177 = vpack.c.b16 %v168, %v167
    %v178 = vpack.c.b16 %v170, %v169
    %187 = vmatpush.bf16.msra.mxu0 %v178
    %188 = vmatpush.bf16.msra.mxu0 %v177
    %189 = vmatpush.bf16.msra.mxu0 %v176
    %190 = vmatpush.bf16.msra.mxu0 %v175
    %191 = vmatpush.bf16.msra.mxu0 %v174
    %192 = vmatpush.bf16.msra.mxu0 %v173
    %193 = vmatpush.bf16.msra.mxu0 %v172
    %194 = vmatpush.bf16.msra.mxu0 %v171
    %195 = vmatmul.bf16.gmra.mxu0 %v135
    %v196 = vpop.f32.mrf.mxu0
    %v197 = vadd.f32 %v137, %v196
    %v198 = vpop.f32.mrf.mxu0
    %199 = vdwg.mxu0
    %vm200 = vcmp.gt.f32.partialorder %v197, 0.0
    %v201 = vmul.f32 %v197, 0.01
    %v202 = vsel %vm200, %v197, %v201
    %s203 = scalar_lea.vmem [#allocation2], 128
    %v204 = vld [vmem:[%s203] sm:$0xf]
    %v205 = vld [vmem:[%s203 + $0x4] sm:$0xf]
    %v206 = vld [vmem:[%s203 + $0x8] sm:$0xf]
    %v207 = vld [vmem:[%s203 + $0xc] sm:$0xf]
    %v208 = vld [vmem:[%s203 + $0x10] sm:$0xf]
    %v209 = vld [vmem:[%s203 + $0x14] sm:$0xf]
    %v210 = vld [vmem:[%s203 + $0x18] sm:$0xf]
    %v211 = vld [vmem:[%s203 + $0x1c] sm:$0xf]
    %v212 = vld [vmem:[%s203 + $0x20] sm:$0xf]
    %v213 = vld [vmem:[%s203 + $0x24] sm:$0xf]
    %v214 = vld [vmem:[%s203 + $0x28] sm:$0xf]
    %v215 = vld [vmem:[%s203 + $0x2c] sm:$0xf]
    %v216 = vld [vmem:[%s203 + $0x30] sm:$0xf]
    %v217 = vld [vmem:[%s203 + $0x34] sm:$0xf]
    %v218 = vld [vmem:[%s203 + $0x38] sm:$0xf]
    %v219 = vld [vmem:[%s203 + $0x3c] sm:$0xf]
    %s220 = scalar_lea.vmem %s2, 2
    %v221 = vld [vmem:[%s220] sm:$0x1]
    %v222 = vpack.c.bf16 %v202, %v202
    %v224 = vperm.slane %v221, 0
    %v242 = vunpack.c.l.b16 %v204
    %v243 = vunpack.c.l.b16 %v205
    %v244 = vunpack.c.l.b16 %v206
    %v245 = vunpack.c.l.b16 %v207
    %v246 = vunpack.c.l.b16 %v208
    %v247 = vunpack.c.l.b16 %v209
    %v248 = vunpack.c.l.b16 %v210
    %v249 = vunpack.c.l.b16 %v211
    %v250 = vunpack.c.l.b16 %v212
    %v251 = vunpack.c.l.b16 %v213
    %v252 = vunpack.c.l.b16 %v214
    %v253 = vunpack.c.l.b16 %v215
    %v254 = vunpack.c.l.b16 %v216
    %v255 = vunpack.c.l.b16 %v217
    %v256 = vunpack.c.l.b16 %v218
    %v257 = vunpack.c.l.b16 %v219
    %v258 = vpack.c.b16 %v243, %v242
    %v259 = vpack.c.b16 %v245, %v244
    %v260 = vpack.c.b16 %v247, %v246
    %v261 = vpack.c.b16 %v249, %v248
    %v262 = vpack.c.b16 %v251, %v250
    %v263 = vpack.c.b16 %v253, %v252
    %v264 = vpack.c.b16 %v255, %v254
    %v265 = vpack.c.b16 %v257, %v256
    %274 = vmatpush.bf16.msra.mxu0 %v265
    %275 = vmatpush.bf16.msra.mxu0 %v264
    %276 = vmatpush.bf16.msra.mxu0 %v263
    %277 = vmatpush.bf16.msra.mxu0 %v262
    %278 = vmatpush.bf16.msra.mxu0 %v261
    %279 = vmatpush.bf16.msra.mxu0 %v260
    %280 = vmatpush.bf16.msra.mxu0 %v259
    %281 = vmatpush.bf16.msra.mxu0 %v258
    %282 = vmatmul.bf16.gmra.mxu0 %v222
    %v283 = vpop.f32.mrf.mxu0
    %v284 = vadd.f32 %v224, %v283
    %v285 = vpop.f32.mrf.mxu0
    %286 = vdwg.mxu0
    %v287 = vsub.f32 0.0, %v284
    %v288 = vmul.f32 %v287, 1.442695
    %v289 = vpow.pop %v288
    %v290 = vadd.f32 %v289, 1.0
    %v291 = vrcp.pop %v290
    %v292 = vmul.f32 %v290, %v291
    %v293 = vsub.f32 1.0, %v292
    %v294 = vmul.f32 %v291, %v293
    %v295 = vadd.f32 %v291, %v294
    %vm296 = vweird.f32 %v290
    %vm297 = vweird.f32 %v291
    %vm298 = vmor %vm296, %vm297
    %v299 = vsel %vm298, %v291, %v295
    %v300 = vand.u32 2147483647, %v290
    %vm301 = vcmp.eq.f32.partialorder %v300, 8.507059e+37
    %v302 = vand.u32 %v290, 2147483648
    %v303 = vor.u32 1.1754944e-38, %v302
    %v304 = vsel %vm301, %v303, %v299
    %v305 = vmul.f32 1.0, %v304
    %306 = vst [vmem:[%s3] sm:$0xff] %v305
    // Predicated region
    $region18: #{simple_fc_forward.1} parent=1 // pred_check
      _
    $region19: #{simple_fc_forward.1} parent=1 // pred_check_branch
      %308 = sbr.rel (0) target = $region21
    $region20: #{simple_fc_forward.1} parent=1 // pred_region
      _
    $region21: #{simple_fc_forward.1} parent=1 // pred_fallthru
      _
    // Predicated region
    $region22: #{simple_fc_forward.1} parent=1 // pred_check
      _
    $region23: #{simple_fc_forward.1} parent=1 // pred_check_branch
      %310 = sbr.rel (0) target = $region25
    $region24: #{simple_fc_forward.1} parent=1 // pred_region
      _
    $region25: #{simple_fc_forward.1} parent=1 // pred_fallthru
      _
    %311 = vsyncpa [#allocation3], 1

</llo_original>
